<compile_context>
chip_gen: v5e
topology: v5e:2x2
jax: 0.10.0
libtpu: 0.0.40
codegen_flags: <defaults>
</compile_context>

<pallas_src>
import jax
import jax.numpy as jnp
from jax import lax
from jax.experimental import pallas as pl
from jax.experimental.pallas import tpu as pltpu


def _round_up(x, m):
    return (x + m - 1) // m * m


def _crepe_layer_kernel(p_ref, w_ref, params_ref, o_ref):
    # p_ref:      (1, 2*TL, K)  im2col patches; rows [0, TL) = even conv
    #             positions, rows [TL, 2*TL) = odd conv positions of the tile.
    # w_ref:      (K, TCO)      flattened conv weight tile.
    # params_ref: (3, TCO) f32  rows = [conv bias; bn scale; bn shift].
    # o_ref:      (1, TL, TCO)  max-pooled output tile.
    tl = o_ref.shape[1]
    y = jnp.dot(p_ref[0], w_ref[...], preferred_element_type=jnp.float32)
    bias = params_ref[0:1, :]
    scale = params_ref[1:2, :]
    shift = params_ref[2:3, :]
    y = jnp.maximum(y + bias, 0.0) * scale + shift
    # MaxPool1d(kernel=2, stride=2) == elementwise max of the even-position
    # half and the odd-position half (both static, 8-aligned slices).
    o_ref[0] = jnp.maximum(y[:tl, :], y[tl:, :]).astype(o_ref.dtype)


def crepe_layer_forward(x_ncl, conv_w, conv_b, bn_gamma, bn_beta,
                        bn_mean, bn_var, *, stride, eps=1e-5,
                        out_dtype=jnp.bfloat16, layout="ncl",
                        compute_dtype=jnp.bfloat16):
    """Inference forward of CrepeLayer.

    x_ncl:  (N, C_in, L) float32         (PyTorch NCL layout)
    conv_w: (C_out, C_in, width)         (PyTorch Conv1d weight layout)
    Returns (N, C_out, l_out // 2) in `out_dtype` (layout="ncl"), or
            (N, l_out // 2, C_out)       (layout="nlc", for chained layers),
    with l_out = ceil(L / stride).
    """
    n, c_in, l = x_ncl.shape
    c_out, _, width = conv_w.shape

    # 'same' padding exactly as Conv1d_samePadding.same_padding_1d
    # (dilation=1; the odd extra element goes on the RIGHT, as in the module).
    l_out = (l + stride - 1) // stride
    pad_total = max(0, (l_out - 1) * stride + (width - 1) + 1 - l)
    pad_l = pad_total // 2
    pad_r = pad_total - pad_l

    pool_out = l_out // 2  # MaxPool1d(2) drops a trailing odd element.
    if pool_out == 0:
        shape = (n, 0, c_out) if layout == "nlc" else (n, c_out, 0)
        return jnp.zeros(shape, dtype=out_dtype)

    # ---- wrapper glue: layout + im2col (stride folded here; the kernel only
    # ever sees contiguous, lane-dense tiles) --------------------------------
    x_nlc = jnp.transpose(x_ncl, (0, 2, 1)).astype(compute_dtype)  # (N, L, C_in)
    x_nlc = jnp.pad(x_nlc, ((0, 0), (pad_l, pad_r), (0, 0)))

    # im2col from `width` static strided slices + one concat (no gather):
    #   patches[b, p, k*c_in + c] = x_pad[b, p*stride + k, c]
    # TODO(synk): for very large width/stride ratios, assemble the patches
    # in-kernel from a raw x slab (memory_space=pl.ANY + make_async_copy) to
    # remove the remaining width/stride HBM read amplification.
    k_dim = width * c_in
    span = (l_out - 1) * stride + 1
    slabs = [x_nlc[:, k:k + span:stride, :] for k in range(width)]
    patches = jnp.concatenate(slabs, axis=-1)            # (N, l_out, k_dim)

    # Split conv positions into even/odd for the fused in-kernel maxpool.
    pe = patches[:, 0:2 * pool_out:2, :]                 # (N, pool_out, k_dim)
    po = patches[:, 1:2 * pool_out:2, :]

    # Pooled-L tile from a VMEM budget: up to 512 rows, keeping the (2*TL, K)
    # patch tile under ~4 MiB even for very wide layers.
    itemsize = jnp.dtype(compute_dtype).itemsize
    tl = min(512, _round_up(pool_out, 8))
    rows_cap = max(8, ((4 << 20) // max(1, 2 * k_dim * itemsize)) // 8 * 8)
    tl = max(8, min(tl, rows_cap))
    pool_pad = _round_up(pool_out, tl)
    n_lt = pool_pad // tl
    if pool_pad != pool_out:
        pad_rows = ((0, 0), (0, pool_pad - pool_out), (0, 0))
        pe = jnp.pad(pe, pad_rows)
        po = jnp.pad(po, pad_rows)

    # Pack each pooled-L tile as [even TL rows ; odd TL rows] so the kernel
    # issues ONE matmul per grid cell and pools with a static-slice maximum.
    pe = pe.reshape(n, n_lt, tl, k_dim)
    po = po.reshape(n, n_lt, tl, k_dim)
    fused = jnp.concatenate([pe, po], axis=2).reshape(n, n_lt * 2 * tl, k_dim)

    # C_out tiling: lane-dense 128-wide output/weight tiles, >=2 grid cells
    # for small batch/length (both v7x TensorCores get work).
    if c_out > 128 and c_out % 128 == 0:
        tco = 128
    else:
        tco = c_out
    n_ct = c_out // tco

    # Flattened 2D weight: w2[k * c_in + c, o] = conv_w[o, c, k].
    w2 = jnp.transpose(conv_w, (2, 1, 0)).reshape(k_dim, c_out)
    w2 = w2.astype(compute_dtype)

    # conv bias + inference BN folded into a single (3, c_out) f32 params array.
    scale = (bn_gamma / jnp.sqrt(bn_var + eps)).astype(jnp.float32)
    shift = (bn_beta - bn_mean * scale).astype(jnp.float32)
    params = jnp.stack([conv_b.astype(jnp.float32), scale, shift], axis=0)

    # Scoped-VMEM budget for the chosen tiles (double buffered) with headroom,
    # capped well below v7x's 64 MiB physical VMEM.
    # TODO(synk): real CREPE layers with width*c_in up to ~64K need an extra
    # K grid axis ("arbitrary") with an f32 accumulator scratch so the weight
    # tile does not blow the v7x VMEM budget; not needed for these shapes.
    out_itemsize = jnp.dtype(out_dtype).itemsize
    est = 2 * (2 * tl * k_dim * itemsize           # fused patch tile
               + k_dim * tco * itemsize            # weight tile
               + 8 * _round_up(tco, 128) * 4       # params tile (padded)
               + tl * tco * out_itemsize)          # output tile
    vmem_limit = int(min(48 << 20, max(16 << 20, 3 * est)))

    out_nlc = pl.pallas_call(
        _crepe_layer_kernel,
        out_shape=jax.ShapeDtypeStruct((n, pool_pad, c_out), out_dtype),
        grid_spec=pltpu.PrefetchScalarGridSpec(
            num_scalar_prefetch=0,
            grid=(n, n_lt, n_ct),
            in_specs=[
                pl.BlockSpec((1, 2 * tl, k_dim), lambda b, t, j: (b, t, 0)),
                pl.BlockSpec((k_dim, tco), lambda b, t, j: (0, j)),
                pl.BlockSpec((3, tco), lambda b, t, j: (0, j)),
            ],
            out_specs=pl.BlockSpec((1, tl, tco), lambda b, t, j: (b, t, j)),
        ),
        compiler_params=pltpu.CompilerParams(
            dimension_semantics=("parallel", "parallel", "parallel"),
            vmem_limit_bytes=vmem_limit),
    )(fused, w2, params)

    # TODO(synk): Dropout(p=0.25) is identity in eval mode; training-mode
    # stochastic masking and BN batch-stat updates are not implemented.

    out_nlc = out_nlc[:, :pool_out, :]
    if layout == "nlc":
        return out_nlc                        # keep (N, L, C) between layers
    return jnp.transpose(out_nlc, (0, 2, 1))  # back to PyTorch NCL layout


def ref_forward(x_ncl, conv_w, conv_b, gamma, beta, mean, var, *, stride,
                eps=1e-5):
    """Pure-JAX f32 reference (inference semantics) for correctness check."""
    n, c_in, l = x_ncl.shape
    c_out, _, width = conv_w.shape
    l_out = (l + stride - 1) // stride
    pad_total = max(0, (l_out - 1) * stride + (width - 1) + 1 - l)
    pad_l = pad_total // 2
    pad_r = pad_total - pad_l
    x_pad = jnp.pad(x_ncl, ((0, 0), (0, 0), (pad_l, pad_r)))
    y = lax.conv_general_dilated(
        x_pad, conv_w, window_strides=(stride,), padding="VALID",
        dimension_numbers=("NCH", "OIH", "NCH"))
    y = y + conv_b[None, :, None]
    y = jnp.maximum(y, 0.0)
    y = ((y - mean[None, :, None]) / jnp.sqrt(var[None, :, None] + eps)
         * gamma[None, :, None] + beta[None, :, None])
    lp = y.shape[-1] // 2
    y = jnp.max(y[..., : 2 * lp].reshape(n, c_out, lp, 2), axis=-1)
    return y


def _run_case(key, n, c_in, l, filters, width, stride, layout):
    k1, k2, k3, k4, k5, k6, k7 = jax.random.split(key, 7)
    x = jax.random.normal(k1, (n, c_in, l), dtype=jnp.float32)
    conv_w = 0.1 * jax.random.normal(k2, (filters, c_in, width),
                                     dtype=jnp.float32)
    conv_b = 0.1 * jax.random.normal(k3, (filters,), dtype=jnp.float32)
    gamma = 1.0 + 0.1 * jax.random.normal(k4, (filters,), dtype=jnp.float32)
    beta = 0.1 * jax.random.normal(k5, (filters,), dtype=jnp.float32)
    mean = 0.1 * jax.random.normal(k6, (filters,), dtype=jnp.float32)
    var = jnp.abs(jax.random.normal(k7, (filters,), dtype=jnp.float32)) + 0.5

    out = crepe_layer_forward(x, conv_w, conv_b, gamma, beta, mean, var,
                              stride=stride, layout=layout)
    out = jax.block_until_ready(out)
    ref = ref_forward(x, conv_w, conv_b, gamma, beta, mean, var, stride=stride)
    ref = jax.block_until_ready(ref)

    out_ncl = jnp.transpose(out, (0, 2, 1)) if layout == "nlc" else out
    out_f32 = out_ncl.astype(jnp.float32)

    l_out = (l + stride - 1) // stride
    expect = (n, filters, l_out // 2)
    assert out_ncl.shape == ref.shape == expect, (out_ncl.shape, ref.shape,
                                                  expect)
    max_err = float(jnp.max(jnp.abs(out_f32 - ref)))
    # bf16 matmul operands + bf16 output -> modest tolerance; accum is f32.
    if not bool(jnp.allclose(out_f32, ref, atol=6e-2, rtol=3e-2)):
        raise AssertionError(f"Pallas kernel mismatch vs reference, "
                             f"max abs err={max_err}")
    return max_err


if __name__ == "__main__":
    key = jax.random.PRNGKey(0)
    ka, kb = jax.random.split(key, 2)

    # Case A: CREPE-layer-shaped, stride 1 (in=4, filters=128, width=8),
    # PyTorch NCL output layout.
    _run_case(ka, n=2, c_in=4, l=64, filters=128, width=8, stride=1,
              layout="ncl")

    # Case B: strided first-layer style (in=1, stride=4) with odd conv length
    # (exercises stride folding, MaxPool truncation, row padding, and the
    # c_out grid axis); NLC output layout as used when chaining layers.
    _run_case(kb, n=1, c_in=1, l=250, filters=256, width=32, stride=4,
              layout="nlc")

    print("KERNEL_OK")
</pallas_src>

<mosaic_0001>
module attributes {stable_mosaic.version = 11 : i64} {
  func.func @_crepe_layer_kernel(%arg0: i32, %arg1: i32, %arg2: i32, %arg3: memref<1x64x32xbf16, #tpu.memory_space<vmem>>, %arg4: memref<32x128xbf16, #tpu.memory_space<vmem>>, %arg5: memref<3x128xf32, #tpu.memory_space<vmem>>, %arg6: memref<1x32x128xbf16, #tpu.memory_space<vmem>>) attributes {dimension_semantics = [#tpu.dimension_semantics<parallel>, #tpu.dimension_semantics<parallel>, #tpu.dimension_semantics<parallel>], iteration_bounds = array<i64: 2, 1, 1>, scalar_prefetch = 0 : i64, scratch_operands = 0 : i64, tpu.core_type = #tpu.core_type<tc>, window_params = [{transform_indices = @transform_0, window_bounds = array<i64: 1, 64, 32>}, {transform_indices = @transform_1, window_bounds = array<i64: 32, 128>}, {transform_indices = @transform_2, window_bounds = array<i64: 3, 128>}, {transform_indices = @transform_3, window_bounds = array<i64: 1, 32, 128>}]} {
    %c0 = arith.constant 0 : index
    %c0_0 = arith.constant 0 : index
    %c0_1 = arith.constant 0 : index
    %0 = vector.load %arg3[%c0, %c0_0, %c0_1] : memref<1x64x32xbf16, #tpu.memory_space<vmem>>, vector<1x64x32xbf16>
    %1 = vector.shape_cast %0 : vector<1x64x32xbf16> to vector<64x32xbf16>
    %c0_2 = arith.constant 0 : index
    %c0_3 = arith.constant 0 : index
    %2 = vector.load %arg4[%c0_2, %c0_3] : memref<32x128xbf16, #tpu.memory_space<vmem>>, vector<32x128xbf16>
    %cst = arith.constant dense<0.000000e+00> : vector<64x128xf32>
    %3 = tpu.matmul %1, %2, %cst {dimension_numbers = #tpu.dot_dimension_numbers<[1], [0], [0], [1], [0, 0, 1, 1], [], []>} : vector<64x32xbf16>, vector<32x128xbf16>, vector<64x128xf32> -> vector<64x128xf32>
    %c0_4 = arith.constant 0 : index
    %c0_5 = arith.constant 0 : index
    %4 = vector.load %arg5[%c0_4, %c0_5] : memref<3x128xf32, #tpu.memory_space<vmem>>, vector<1x128xf32>
    %c1 = arith.constant 1 : index
    %c0_6 = arith.constant 0 : index
    %5 = vector.load %arg5[%c1, %c0_6] : memref<3x128xf32, #tpu.memory_space<vmem>>, vector<1x128xf32>
    %c2 = arith.constant 2 : index
    %c0_7 = arith.constant 0 : index
    %6 = vector.load %arg5[%c2, %c0_7] : memref<3x128xf32, #tpu.memory_space<vmem>>, vector<1x128xf32>
    %7 = vector.broadcast %4 : vector<1x128xf32> to vector<64x128xf32>
    %8 = arith.addf %3, %7 : vector<64x128xf32>
    %cst_8 = arith.constant 0.000000e+00 : f32
    %9 = vector.broadcast %cst_8 : f32 to vector<64x128xf32>
    %10 = arith.maximumf %8, %9 : vector<64x128xf32>
    %11 = vector.broadcast %5 : vector<1x128xf32> to vector<64x128xf32>
    %12 = arith.mulf %10, %11 : vector<64x128xf32>
    %13 = vector.broadcast %6 : vector<1x128xf32> to vector<64x128xf32>
    %14 = arith.addf %12, %13 : vector<64x128xf32>
    %15 = vector.extract_strided_slice %14 {offsets = [0, 0], sizes = [32, 128], strides = [1, 1]} : vector<64x128xf32> to vector<32x128xf32>
    %16 = vector.extract_strided_slice %14 {offsets = [32, 0], sizes = [32, 128], strides = [1, 1]} : vector<64x128xf32> to vector<32x128xf32>
    %17 = arith.maximumf %15, %16 : vector<32x128xf32>
    %18 = arith.truncf %17 : vector<32x128xf32> to vector<32x128xbf16>
    %c0_9 = arith.constant 0 : index
    %c0_10 = arith.constant 0 : index
    %c0_11 = arith.constant 0 : index
    %19 = vector.load %arg6[%c0_9, %c0_10, %c0_11] : memref<1x32x128xbf16, #tpu.memory_space<vmem>>, vector<1x32x128xbf16>
    %20 = vector.shape_cast %19 : vector<1x32x128xbf16> to vector<32x128xbf16>
    %21 = vector.shape_cast %18 : vector<32x128xbf16> to vector<1x32x128xbf16>
    tpu.vector_store %arg6[%c0_9, %c0_10, %c0_11], %21 {strides = array<i32>} : memref<1x32x128xbf16, #tpu.memory_space<vmem>>, vector<1x32x128xbf16>,
    return
  }
  func.func @transform_0(%arg0: i32, %arg1: i32, %arg2: i32) -> (i32, i32, i32) {
    %c0_i32 = arith.constant 0 : i32
    %c0_i32_0 = arith.constant 0 : i32
    return %arg0, %arg1, %c0_i32 : i32, i32, i32
  }
  func.func @transform_1(%arg0: i32, %arg1: i32, %arg2: i32) -> (i32, i32) {
    %c0_i32 = arith.constant 0 : i32
    %c0_i32_0 = arith.constant 0 : i32
    return %c0_i32, %arg2 : i32, i32
  }
  func.func @transform_2(%arg0: i32, %arg1: i32, %arg2: i32) -> (i32, i32) {
    %c0_i32 = arith.constant 0 : i32
    %c0_i32_0 = arith.constant 0 : i32
    return %c0_i32, %arg2 : i32, i32
  }
  func.func @transform_3(%arg0: i32, %arg1: i32, %arg2: i32) -> (i32, i32, i32) {
    %c0_i32 = arith.constant 0 : i32
    return %arg0, %arg1, %arg2 : i32, i32, i32
  }
}

</mosaic_0001>

<llo_original>
// kernel: tpu_custom_call.1
$region0: #{tpu_custom_call.1}
  #allocation0 [shape = 'u32[]', space=smem, size = 0x4, offset = 0x4, fixed_abs, tag = 'smem constant byte address 0x4 - core index']
  #allocation1 [shape = 'u32[72,128]{1,0:T(1,128)}', space=vmem, size = 0x9000, scoped, tag = 'internal scratch']
  %s0 = inlined_call_operand.vmem [shape: bf16[2,64,32], index: 0, kind: input, shape index: {}]
  %s1 = inlined_call_operand.vmem [shape: bf16[32,128], index: 1, kind: input, shape index: {}]
  %s2 = inlined_call_operand.vmem [shape: f32[3,128], index: 2, kind: input, shape index: {}]
  %s3 = inlined_call_operand.hbm [shape: bf16[2,32,128], index: 3, kind: output, shape index: {}]
  %s4 = sld [smem:[#allocation0]]
  $region45: #{tpu_custom_call.1} parent=0
    _
  %s6 = ssub.s32 1, %s4
  %s7 = scalar_select 0, %s6, %s4
  $region1: #{tpu_custom_call.1} parent=0
    #allocation2 [shape = 'u8[16384]{0}', space=vmem, size = 0x4000, scoped, tag = 'output window, operand 0']
    #allocation3 [shape = 's32[2]{0}', space=sflag, size = 0x8, scoped, tag = 'scoped memory for tpu_custom_call.1']
    %8 = vsyncpa [#allocation3], 0
    %s9 = scalar_lea.sflag [#allocation3], 1
    %10 = vsyncpa %s9, 0
    loop: start=0, step=1, limit=4
    $region2: #{tpu_custom_call.1} parent=1 // loop_pre_header
      _
    $region3: #{tpu_custom_call.1} parent=1 // loop_header
      %s12 = sphi 0, %s16
      %p13 = scmp.ge.s32.totalorder %s12, 4
      %s19 = sphi 0, %s38
      %s20 = sphi 0, %s34
      %s21 = sphi 0, %s30
      %s22 = sphi 0, %s19
      %s23 = sphi 0, %s20
      %s24 = sphi 0, %s21
      %s25 = sphi 0, %s22
      %s26 = sphi 0, %s23
      %s27 = sphi 0, %s24
      %s43 = sphi 0, %s45
      %s46 = sphi 0, %s43
      %s47 = sphi 0, %s46
      %s63 = sphi 0, %s47
      %s69 = sphi 0, %s71
      %s72 = sphi 0, %s69
      %s73 = sphi 0, %s72
      %s89 = sphi 0, %s73
      %s95 = sphi 0, %s97
      %s98 = sphi 0, %s95
      %s99 = sphi 0, %s98
      %s115 = sphi 0, %s99
      %s125 = sphi 0, %s127
      %s128 = sphi 0, %s125
      %s129 = sphi 0, %s128
      %s145 = sphi 0, %s129
    $region4: #{tpu_custom_call.1} parent=1 // loop_header_branch
      %15 = sbr.rel (%p13) target = $region8
    $region5: #{tpu_custom_call.1} parent=1 // loop_body
      %s17 = ssub.s32 %s12, 1
      %s18 = ssub.s32 %s12, 2
      %s28 = sadd.s32 1, %s21
      %p29 = scmp.ge.s32.totalorder %s28, 1
      %s30 = scalar_select %p29, 0, %s28
      %s31 = sadd.s32 1, %s20
      %s32 = scalar_select %p29, %s31, %s20
      %p33 = scmp.ge.s32.totalorder %s32, 1
      %s34 = scalar_select %p33, 0, %s32
      %s35 = sadd.s32 1, %s19
      %s36 = scalar_select %p33, %s35, %s19
      %p37 = scmp.ge.s32.totalorder %s36, 2
      %s38 = scalar_select %p37, 0, %s36
      %s39 = ssub.s32 %s19, %s38
      %s40 = ssub.s32 %s20, %s34
      %s41 = sor.u32 %s39, %s40
      %p42 = scmp.eq.s32.totalorder %s41, 0
      %s44 = sadd.s32 %s43, 1
      %s45 = scalar_select %p42, %s43, %s44
      %p48 = pneg %p42
      %p49 = scmp.eq.s32.totalorder %s12, 1
      %p50 = por %p48, %p49
      %p51 = scmp.ne.s32.totalorder %s43, %s46
      %p52 = scmp.eq.s32.totalorder %s12, 0
      %p53 = por %p51, %p52
      %p54 = scmp.ne.s32.totalorder %s43, %s46
      %p55 = scmp.eq.s32.totalorder %s17, 1
      %p56 = por %p54, %p55
      %p57 = scmp.ne.s32.totalorder %s46, %s47
      %p58 = scmp.eq.s32.totalorder %s17, 0
      %p59 = por %p57, %p58
      %p60 = scmp.ne.s32.totalorder %s46, %s47
      %p61 = scmp.eq.s32.totalorder %s18, 1
      %p62 = por %p60, %p61
      %p64 = scmp.ne.s32.totalorder %s47, %s63
      %p65 = scmp.eq.s32.totalorder %s18, 0
      %p66 = por %p64, %p65
      %s67 = ssub.s32 %s21, %s30
      %p68 = scmp.eq.s32.totalorder %s67, 0
      %s70 = sadd.s32 %s69, 1
      %s71 = scalar_select %p68, %s69, %s70
      %p74 = pneg %p68
      %p75 = scmp.eq.s32.totalorder %s12, 1
      %p76 = por %p74, %p75
      %p77 = scmp.ne.s32.totalorder %s69, %s72
      %p78 = scmp.eq.s32.totalorder %s12, 0
      %p79 = por %p77, %p78
      %p80 = scmp.ne.s32.totalorder %s69, %s72
      %p81 = scmp.eq.s32.totalorder %s17, 1
      %p82 = por %p80, %p81
      %p83 = scmp.ne.s32.totalorder %s72, %s73
      %p84 = scmp.eq.s32.totalorder %s17, 0
      %p85 = por %p83, %p84
      %p86 = scmp.ne.s32.totalorder %s72, %s73
      %p87 = scmp.eq.s32.totalorder %s18, 1
      %p88 = por %p86, %p87
      %p90 = scmp.ne.s32.totalorder %s73, %s89
      %p91 = scmp.eq.s32.totalorder %s18, 0
      %p92 = por %p90, %p91
      %s93 = ssub.s32 %s21, %s30
      %p94 = scmp.eq.s32.totalorder %s93, 0
      %s96 = sadd.s32 %s95, 1
      %s97 = scalar_select %p94, %s95, %s96
      %p100 = pneg %p94
      %p101 = scmp.eq.s32.totalorder %s12, 1
      %p102 = por %p100, %p101
      %p103 = scmp.ne.s32.totalorder %s95, %s98
      %p104 = scmp.eq.s32.totalorder %s12, 0
      %p105 = por %p103, %p104
      %p106 = scmp.ne.s32.totalorder %s95, %s98
      %p107 = scmp.eq.s32.totalorder %s17, 1
      %p108 = por %p106, %p107
      %p109 = scmp.ne.s32.totalorder %s98, %s99
      %p110 = scmp.eq.s32.totalorder %s17, 0
      %p111 = por %p109, %p110
      %p112 = scmp.ne.s32.totalorder %s98, %s99
      %p113 = scmp.eq.s32.totalorder %s18, 1
      %p114 = por %p112, %p113
      %p116 = scmp.ne.s32.totalorder %s99, %s115
      %p117 = scmp.eq.s32.totalorder %s18, 0
      %p118 = por %p116, %p117
      %s119 = ssub.s32 %s19, %s38
      %s120 = ssub.s32 %s20, %s34
      %s121 = sor.u32 %s119, %s120
      %s122 = ssub.s32 %s21, %s30
      %s123 = sor.u32 %s121, %s122
      %p124 = scmp.eq.s32.totalorder %s123, 0
      %s126 = sadd.s32 %s125, 1
      %s127 = scalar_select %p124, %s125, %s126
      %p130 = pneg %p124
      %p131 = scmp.eq.s32.totalorder %s12, 1
      %p132 = por %p130, %p131
      %p133 = scmp.ne.s32.totalorder %s125, %s128
      %p134 = scmp.eq.s32.totalorder %s12, 0
      %p135 = por %p133, %p134
      %p136 = scmp.ne.s32.totalorder %s125, %s128
      %p137 = scmp.eq.s32.totalorder %s17, 1
      %p138 = por %p136, %p137
      %p139 = scmp.ne.s32.totalorder %s128, %s129
      %p140 = scmp.eq.s32.totalorder %s17, 0
      %p141 = por %p139, %p140
      %p142 = scmp.ne.s32.totalorder %s128, %s129
      %p143 = scmp.eq.s32.totalorder %s18, 1
      %p144 = por %p142, %p143
      %p146 = scmp.ne.s32.totalorder %s129, %s145
      %p147 = scmp.eq.s32.totalorder %s18, 0
      %p148 = por %p146, %p147
      %p149 = scmp.le.s32.totalorder 1, %s12
      %p150 = scmp.lt.s32.totalorder %s12, 3
      %p151 = pnand %p149, %p150
      %p152 = pneg %p151
      // Predicated region
      $region9: #{tpu_custom_call.1} parent=5 // pred_check
        _
      $region10: #{tpu_custom_call.1} parent=5 // pred_check_branch
        %154 = sbr.rel (%p151) target = $region12
      $region11: #{tpu_custom_call.1} parent=5 // pred_region
        %s155 = ssub.s32 %s12, 1
        // Predicated region
        $region13: #{tpu_custom_call.1} parent=11 // pred_check
          %p156 = pneg %p85
        $region14: #{tpu_custom_call.1} parent=11 // pred_check_branch
          %158 = sbr.rel (%p156) target = $region16
        $region15: #{tpu_custom_call.1} parent=11 // pred_region
          %p159 = scmp.lt.s32.totalorder %s24, 0
          %s160 = scalar_select %p159, %s24, 0
          %s161 = smul.addr %s160, 4
          %s162 = scalar_lea.vmem %s1, %s161
        $region16: #{tpu_custom_call.1} parent=11 // pred_fallthru
          _
        // Predicated region
        $region17: #{tpu_custom_call.1} parent=11 // pred_check
          %p163 = pneg %p111
        $region18: #{tpu_custom_call.1} parent=11 // pred_check_branch
          %165 = sbr.rel (%p163) target = $region20
        $region19: #{tpu_custom_call.1} parent=11 // pred_region
          %p166 = scmp.lt.s32.totalorder %s24, 0
          %s167 = scalar_select %p166, %s24, 0
          %s168 = smul.addr %s167, 4
          %s169 = scalar_lea.vmem %s2, %s168
        $region20: #{tpu_custom_call.1} parent=11 // pred_fallthru
          _
      $region12: #{tpu_custom_call.1} parent=5 // pred_fallthru
        _
      %p170 = scmp.lt.s32.totalorder %s12, 2
      // Predicated region
      $region21: #{tpu_custom_call.1} parent=5 // pred_check
        %p171 = pneg %p170
      $region22: #{tpu_custom_call.1} parent=5 // pred_check_branch
        %173 = sbr.rel (%p171) target = $region24
      $region23: #{tpu_custom_call.1} parent=5 // pred_region
        // Predicated region
        $region25: #{tpu_custom_call.1} parent=23 // pred_check
          %p174 = pneg %p53
        $region26: #{tpu_custom_call.1} parent=23 // pred_check_branch
          %176 = sbr.rel (%p174) target = $region28
        $region27: #{tpu_custom_call.1} parent=23 // pred_region
          %s177 = smul.u32 8, %s20
          %p178 = scmp.lt.s32.totalorder %s19, 1
          %s179 = scalar_select %p178, %s19, 1
          %p180 = scmp.lt.s32.totalorder %s177, 7
          %s181 = scalar_select %p180, %s177, 7
          %s182 = smul.addr %s179, 8
          %s183 = sadd.s32 %s181, %s182
          %s184 = smul.addr %s183, 4
          %s185 = scalar_lea.vmem %s0, %s184
          %s186 = smul.u32 8, %s20
        $region28: #{tpu_custom_call.1} parent=23 // pred_fallthru
          _
      $region24: #{tpu_custom_call.1} parent=5 // pred_fallthru
        _
      %p187 = scmp.le.s32.totalorder 1, %s12
      %p188 = scmp.lt.s32.totalorder %s12, 3
      %p189 = pnand %p187, %p188
      %p190 = pneg %p189
      // Predicated region
      $region29: #{tpu_custom_call.1} parent=5 // pred_check
        _
      $region30: #{tpu_custom_call.1} parent=5 // pred_check_branch
        %192 = sbr.rel (%p189) target = $region32
      $region31: #{tpu_custom_call.1} parent=5 // pred_region
        %s193 = ssub.s32 %s12, 1
        %s194 = smul.u32 8, %s23
        %p195 = scmp.lt.s32.totalorder %s22, 1
        %s196 = scalar_select %p195, %s22, 1
        %p197 = scmp.lt.s32.totalorder %s194, 7
        %s198 = scalar_select %p197, %s194, 7
        %s199 = smul.addr %s196, 8
        %s200 = sadd.s32 %s198, %s199
        %s201 = smul.addr %s200, 4
        %s202 = scalar_lea.vmem %s0, %s201
        %p203 = pneg %p59
        %p204 = pneg %p56
        %p205 = scmp.lt.s32.totalorder %s24, 0
        %s206 = scalar_select %p205, %s24, 0
        %s207 = smul.addr %s206, 4
        %s208 = scalar_lea.vmem %s1, %s207
        %p209 = pneg %p85
        %p210 = pneg %p82
        %p211 = scmp.lt.s32.totalorder %s24, 0
        %s212 = scalar_select %p211, %s24, 0
        %s213 = smul.addr %s212, 4
        %s214 = scalar_lea.vmem %s2, %s213
        %p215 = pneg %p111
        %p216 = pneg %p108
        %p217 = pneg %p141
        %p218 = pneg %p138
        %s219 = sand.u32 %s128, 1
        %s220 = scalar_lea.sflag [#allocation3], %s219
        %s221 = sand.u32 %s128, 1
        %s222 = smul.addr %s221, 16
        %s223 = scalar_lea.vmem [#allocation2], %s222
        %s224 = smul.u32 8, %s23
        %p225 = scmp.lt.s32.totalorder %s22, 1
        %s226 = scalar_select %p225, %s22, 1
        %p227 = scmp.lt.s32.totalorder %s224, 7
        %s228 = scalar_select %p227, %s224, 7
        %s229 = smul.addr %s226, 8
        %s230 = sadd.s32 %s228, %s229
        %s231 = smul.addr %s230, 4
        %s232 = scalar_lea.vmem %s0, %s231
        %s233 = smul.u32 8, %s23
        %p234 = scmp.lt.s32.totalorder %s24, 0
        %s235 = scalar_select %p234, %s24, 0
        %s236 = smul.addr %s235, 4
        %s237 = scalar_lea.vmem %s1, %s236
        %p238 = scmp.lt.s32.totalorder %s24, 0
        %s239 = scalar_select %p238, %s24, 0
        %s240 = smul.addr %s239, 4
        %s241 = scalar_lea.vmem %s2, %s240
        %s242 = smul.u32 4, %s23
        %v244 = vld [vmem:[%s232] sm:$0xf]
        %v245 = vld [vmem:[%s232 + $0x4] sm:$0xf]
        %v246 = vld [vmem:[%s232 + $0x8] sm:$0xf]
        %v247 = vld [vmem:[%s232 + $0xc] sm:$0xf]
        %v248 = vld [vmem:[%s232 + $0x10] sm:$0xf]
        %v249 = vld [vmem:[%s232 + $0x14] sm:$0xf]
        %v250 = vld [vmem:[%s232 + $0x18] sm:$0xf]
        %v251 = vld [vmem:[%s232 + $0x1c] sm:$0xf]
        %v252 = vld [vmem:[%s237] sm:$0xf]
        %v253 = vld [vmem:[%s237 + $0x4] sm:$0xf]
        %v254 = vld [vmem:[%s237 + $0x8] sm:$0xf]
        %v255 = vld [vmem:[%s237 + $0xc] sm:$0xf]
        %v256 = vld [vmem:[%s241] sm:$0x1]
        %v257 = vld [vmem:[%s241 + $0x1] sm:$0x1]
        %v258 = vld [vmem:[%s241 + $0x2] sm:$0x1]
        %v259 = vperm.slane %v256, 0
        %v268 = vunpack.c.l.b16 %v244
        %v269 = vunpack.c.l.b16 %v245
        %v270 = vunpack.c.l.b16 %v246
        %v271 = vunpack.c.l.b16 %v247
        %v272 = vunpack.c.l.b16 %v248
        %v273 = vunpack.c.l.b16 %v249
        %v274 = vunpack.c.l.b16 %v250
        %v275 = vunpack.c.l.b16 %v251
        %v276 = vpack.c.b16 %v269, %v268
        %v277 = vpack.c.b16 %v271, %v270
        %v278 = vpack.c.b16 %v273, %v272
        %v279 = vpack.c.b16 %v275, %v274
        %v284 = vunpack.c.l.b16 %v252
        %v285 = vunpack.c.l.b16 %v253
        %v286 = vunpack.c.l.b16 %v254
        %v287 = vunpack.c.l.b16 %v255
        %v288 = vpack.c.b16 %v285, %v284
        %v289 = vpack.c.b16 %v287, %v286
        %vm292 = vcmask 261120
        %v294 = vsel %vm292, %v276, 0
        %v297 = vsel %vm292, %v277, 0
        %v300 = vsel %vm292, %v278, 0
        %v303 = vsel %vm292, %v279, 0
        %305 = vmatpush.bf16.msra.mxu0 0
        %306 = vmatpush.bf16.msra.mxu0 0
        %307 = vmatpush.bf16.msra.mxu0 0
        %308 = vmatpush.bf16.msra.mxu0 0
        %309 = vmatpush.bf16.msra.mxu0 0
        %310 = vmatpush.bf16.msra.mxu0 0
        %311 = vmatpush.bf16.msra.mxu0 %v289
        %312 = vmatpush.bf16.msra.mxu0 %v288
        %313 = vmatmul.bf16.gmra.mxu0 %v294
        %v314 = vpop.f32.mrf.mxu0
        %v315 = vadd.f32 %v259, %v314
        %v316 = vpop.f32.mrf.mxu0
        %v317 = vadd.f32 %v259, %v316
        %318 = vmatmul.bf16.gmra.mxu0 %v297
        %v319 = vpop.f32.mrf.mxu0
        %v320 = vadd.f32 %v259, %v319
        %v321 = vpop.f32.mrf.mxu0
        %v322 = vadd.f32 %v259, %v321
        %323 = vmatmul.bf16.gmra.mxu0 %v300
        %v324 = vpop.f32.mrf.mxu0
        %v325 = vadd.f32 %v259, %v324
        %v326 = vpop.f32.mrf.mxu0
        %v327 = vadd.f32 %v259, %v326
        %328 = vmatmul.bf16.gmra.mxu0 %v303
        %v329 = vpop.f32.mrf.mxu0
        %v330 = vadd.f32 %v259, %v329
        %v331 = vpop.f32.mrf.mxu0
        %v332 = vadd.f32 %v259, %v331
        %333 = vdwg.mxu0
        %v334 = vmax.f32 %v315, 0.0
        %v335 = vmax.f32 %v317, 0.0
        %v336 = vmax.f32 %v320, 0.0
        %v337 = vmax.f32 %v322, 0.0
        %v338 = vmax.f32 %v325, 0.0
        %v339 = vmax.f32 %v327, 0.0
        %v340 = vmax.f32 %v330, 0.0
        %v341 = vmax.f32 %v332, 0.0
        %v342 = vperm.slane %v257, 0
        %v343 = vmul.f32 %v334, %v342
        %v344 = vmul.f32 %v335, %v342
        %v345 = vmul.f32 %v336, %v342
        %v346 = vmul.f32 %v337, %v342
        %v347 = vmul.f32 %v338, %v342
        %v348 = vmul.f32 %v339, %v342
        %v349 = vmul.f32 %v340, %v342
        %v350 = vmul.f32 %v341, %v342
        %v351 = vperm.slane %v258, 0
        %v352 = vadd.f32 %v343, %v351
        %v353 = vadd.f32 %v344, %v351
        %v354 = vadd.f32 %v345, %v351
        %v355 = vadd.f32 %v346, %v351
        %v356 = vadd.f32 %v347, %v351
        %v357 = vadd.f32 %v348, %v351
        %v358 = vadd.f32 %v349, %v351
        %v359 = vadd.f32 %v350, %v351
        %v360 = vmax.f32 %v352, %v356
        %v361 = vmax.f32 %v353, %v357
        %v362 = vmax.f32 %v354, %v358
        %v363 = vmax.f32 %v355, %v359
        %v364 = vpack.c.bf16 %v360, %v360
        %v365 = vpack.c.bf16 %v361, %v361
        %v366 = vpack.c.bf16 %v362, %v362
        %v367 = vpack.c.bf16 %v363, %v363
        %368 = vst [vmem:[%s223] sm:$0xf] %v364
        %369 = vst [vmem:[%s223 + $0x4] sm:$0xf] %v365
        %370 = vst [vmem:[%s223 + $0x8] sm:$0xf] %v366
        %371 = vst [vmem:[%s223 + $0xc] sm:$0xf] %v367
        %s372 = sand.u32 %s128, 1
        %s373 = scalar_lea.sflag [#allocation3], %s372
        %s374 = sand.u32 %s128, 1
        %s375 = smul.addr %s374, 16
        %s376 = scalar_lea.vmem [#allocation2], %s375
        // Predicated region
        $region33: #{tpu_custom_call.1} parent=31 // pred_check
          %p377 = pneg %p138
        $region34: #{tpu_custom_call.1} parent=31 // pred_check_branch
          %379 = sbr.rel (%p377) target = $region36
        $region35: #{tpu_custom_call.1} parent=31 // pred_region
          %s380 = smul.u32 4, %s23
          %382 = vsyncadd %s373, 0
          %s383 = sadd.s32 %s24, %s380
          %s384 = smul.addr %s22, 4
          %s385 = sadd.s32 %s383, %s384
          %s386 = smul.addr %s385, 4
          %s387 = scalar_lea.hbm %s3, %s386
          %s388 = sshll.u32 %s376, 4
          %s389 = int_to_ptr.vmem [resolvable:$true] %s388
          %s390 = sshll.u32 %s387, 4
          %s391 = int_to_ptr.hbm [resolvable:$true] %s390
          %396 = dma.vmem_to_hbm [thread:$0]  %s389, 256, %s391, %s373, 64, 64, 4
        $region36: #{tpu_custom_call.1} parent=31 // pred_fallthru
          _
      $region32: #{tpu_custom_call.1} parent=5 // pred_fallthru
        _
      %p397 = scmp.le.s32.totalorder 2, %s12
      // Predicated region
      $region37: #{tpu_custom_call.1} parent=5 // pred_check
        %p398 = pneg %p397
      $region38: #{tpu_custom_call.1} parent=5 // pred_check_branch
        %400 = sbr.rel (%p398) target = $region40
      $region39: #{tpu_custom_call.1} parent=5 // pred_region
        %s401 = ssub.s32 %s12, 2
        // Predicated region
        $region41: #{tpu_custom_call.1} parent=39 // pred_check
          %p402 = pneg %p144
        $region42: #{tpu_custom_call.1} parent=39 // pred_check_branch
          %404 = sbr.rel (%p402) target = $region44
        $region43: #{tpu_custom_call.1} parent=39 // pred_region
          %s405 = sand.u32 %s129, 1
          %s406 = scalar_lea.sflag [#allocation3], %s405
          %s407 = sand.u32 %s129, 1
          %s408 = smul.addr %s407, 16
          %s409 = scalar_lea.vmem [#allocation2], %s408
          %411 = dma.done %s406, 256
        $region44: #{tpu_custom_call.1} parent=39 // pred_fallthru
          _
      $region40: #{tpu_custom_call.1} parent=5 // pred_fallthru
        _
    $region6: #{tpu_custom_call.1} parent=1 // loop_footer
      %s16 = sadd.s32 1, %s12
    $region7: #{tpu_custom_call.1} parent=1 // loop_footer_branch
      %11 = sbr.rel target = $region3
    $region8: #{tpu_custom_call.1} parent=1 // loop_exit
      _
    %412 = vsyncpa [#allocation3], 1
    %s413 = scalar_lea.sflag [#allocation3], 1
    %414 = vsyncpa %s413, 1

</llo_original>
